<compile_context>
chip_gen: v7x
topology: tpu7x:2x2x1
jax: 0.10.0
libtpu: 0.0.40
codegen_flags: <defaults>
</compile_context>

<pallas_src>
import functools

import jax
import jax.numpy as jnp
import numpy as np
from jax.experimental import pallas as pl
from jax.experimental.pallas import tpu as pltpu


def _rnn_core_kernel(x_ref, h0_ref, wih_ref, whh_ref, b_ref, wout_ref, bout_ref,
                     out0_ref, hfin_ref, *,
                     seq_len, batch, input_size, hidden_size,
                     negative_slope, out_activation):
    """Whole forward in one gridless invocation (everything fits comfortably in VMEM)."""
    S, B, I, H = seq_len, batch, input_size, hidden_size

    # Hoisted input projection + recurrent bias for ALL timesteps: one (B*S, I) x (I, H)
    # MXU GEMM (bf16 operands, f32 accumulation). Only h @ W_hh^T stays on the serial chain.
    x2d = x_ref[...].reshape(B * S, I).astype(jnp.bfloat16)
    xw = jnp.dot(x2d, wih_ref[...], preferred_element_type=jnp.float32) + b_ref[...]
    xw = xw.reshape(B, S, H)                     # static per-step slices below

    whh = whh_ref[...]                           # (H, H) bf16, stays resident in vregs
    h = h0_ref[0]                                # (B, H) f32
    h1 = h                                       # overwritten at t == 0 (S >= 1 enforced)

    # Fully unrolled recurrence (S is a small static Python int).
    for t in range(S):
        pre = xw[:, t, :] + jnp.dot(h.astype(jnp.bfloat16), whh,
                                    preferred_element_type=jnp.float32)
        h = jnp.tanh(pre)                        # f32 element-wise (v5e-safe)
        if t == 0:
            h1 = h

    # Output head on output[:, 0, :] (hidden after the first step), hoisted out of the loop
    # so it overlaps with the later recurrence steps' MXU latency.
    y = jnp.dot(h1.astype(jnp.bfloat16), wout_ref[...],
                preferred_element_type=jnp.float32) + bout_ref[...]
    if out_activation == "tanh":
        y = jnp.tanh(y)
    else:                                        # leaky_relu, nn.LeakyReLU() default slope
        y = jnp.where(y >= 0, y, negative_slope * y)

    out0_ref[...] = y
    hfin_ref[0] = h


def pack_params(params):
    """One-time weight packing (transpose, bias fold, bf16 cast).

    Call once at module init and reuse — these ops must stay OFF the per-call dispatch path
    (they do not fuse into the pallas custom call).
    """
    f32 = jnp.float32
    return {
        "wih_t": jnp.asarray(params["w_ih"], f32).T.astype(jnp.bfloat16),    # (I, H)
        "whh_t": jnp.asarray(params["w_hh"], f32).T.astype(jnp.bfloat16),    # (H, H)
        "b": (jnp.asarray(params["b_ih"], f32)
              + jnp.asarray(params["b_hh"], f32)).reshape(1, -1),            # (1, H) f32
        "wout_t": jnp.asarray(params["w_out"], f32).T.astype(jnp.bfloat16),  # (H, I)
        "bout": jnp.asarray(params["b_out"], f32).reshape(1, -1),            # (1, I) f32
    }


@functools.partial(jax.jit, static_argnames=("activation",))
def rnn_core_forward(x, hidden, packed, activation="leaky_relu"):
    """x: (B, S, I) batch-first (PyTorch layout); hidden: (1, B, H); packed: pack_params(...).

    Returns (out, hidden_final) with shapes ((B, I), (1, B, H)).
    """
    B, S, I = x.shape
    H = hidden.shape[-1]
    if S < 1:
        raise ValueError("RNNCore forward requires at least one timestep (uses output[:, 0, :]).")

    kernel = functools.partial(
        _rnn_core_kernel,
        seq_len=S, batch=B, input_size=I, hidden_size=H,
        negative_slope=0.01, out_activation=activation)
    vmem = pl.BlockSpec(memory_space=pltpu.MemorySpace.VMEM)

    out0, hfin = pl.pallas_call(
        kernel,
        out_shape=(jax.ShapeDtypeStruct((B, I), jnp.float32),
                   jax.ShapeDtypeStruct((1, B, H), jnp.float32)),
        in_specs=[vmem] * 7,
        out_specs=(vmem, vmem),
    )(x.astype(jnp.float32), hidden.astype(jnp.float32),
      packed["wih_t"], packed["whh_t"], packed["b"],
      packed["wout_t"], packed["bout"])

    return out0, hfin


def _reference_forward(x, hidden, params, activation="leaky_relu"):
    """Pure-JAX f32 reference mirroring the PyTorch forward."""
    B, S, I = x.shape
    h = hidden[0]
    w_ih, w_hh = params["w_ih"], params["w_hh"]
    b = params["b_ih"] + params["b_hh"]
    outs = []
    for t in range(S):
        h = jnp.tanh(x[:, t, :] @ w_ih.T + h @ w_hh.T + b)
        outs.append(h)
    y = outs[0] @ params["w_out"].T + params["b_out"]
    if activation == "tanh":
        y = jnp.tanh(y)
    else:
        y = jnp.where(y >= 0, y, 0.01 * y)
    return y, h[None]


def init_params(key, input_size, hidden_size):
    """Deterministic init matching PyTorch shapes (U(-1/sqrt(H), 1/sqrt(H)) style)."""
    k_ih, k_hh, k_bih, k_bhh, k_wo, k_bo = jax.random.split(key, 6)
    k = 1.0 / np.sqrt(hidden_size)
    u = lambda kk, shape, bound: jax.random.uniform(
        kk, shape, dtype=jnp.float32, minval=-bound, maxval=bound)
    return {
        "w_ih": u(k_ih, (hidden_size, input_size), k),
        "w_hh": u(k_hh, (hidden_size, hidden_size), k),
        "b_ih": u(k_bih, (hidden_size,), k),
        "b_hh": u(k_bhh, (hidden_size,), k),
        "w_out": u(k_wo, (input_size, hidden_size), k),
        "b_out": u(k_bo, (input_size,), k),
    }


if __name__ == "__main__":
    # Small shapes consistent with the module's forward.
    batch, seq, input_size, hidden_size = 2, 8, 8, 32
    activation = "leaky_relu"

    key = jax.random.PRNGKey(0)
    k_x, k_p = jax.random.split(key)
    x = jax.random.normal(k_x, (batch, seq, input_size), dtype=jnp.float32)
    hidden = jnp.zeros((1, batch, hidden_size), dtype=jnp.float32)  # init_hidden
    params = init_params(k_p, input_size, hidden_size)
    packed = pack_params(params)        # one-time packing, off the per-call path

    out, h_final = rnn_core_forward(x, hidden, packed, activation=activation)
    out = jax.block_until_ready(out)
    h_final = jax.block_until_ready(h_final)

    ref_out, ref_h = _reference_forward(x, hidden, params, activation=activation)
    # bf16 MXU operands (f32 accumulation) => looser tolerance than the pure-f32 reference.
    np.testing.assert_allclose(np.asarray(out), np.asarray(ref_out), rtol=3e-2, atol=3e-2)
    np.testing.assert_allclose(np.asarray(h_final), np.asarray(ref_h), rtol=3e-2, atol=3e-2)

    assert out.shape == (batch, input_size)
    assert h_final.shape == (1, batch, hidden_size)
    print("KERNEL_OK")
</pallas_src>

<mosaic_0001>
module attributes {stable_mosaic.version = 11 : i64} {
  func.func @_rnn_core_kernel(%arg0: memref<2x8x8xf32, #tpu.memory_space<vmem>>, %arg1: memref<1x2x32xf32, #tpu.memory_space<vmem>>, %arg2: memref<8x32xbf16, #tpu.memory_space<vmem>>, %arg3: memref<32x32xbf16, #tpu.memory_space<vmem>>, %arg4: memref<1x32xf32, #tpu.memory_space<vmem>>, %arg5: memref<32x8xbf16, #tpu.memory_space<vmem>>, %arg6: memref<1x8xf32, #tpu.memory_space<vmem>>, %arg7: memref<2x8xf32, #tpu.memory_space<vmem>>, %arg8: memref<1x2x32xf32, #tpu.memory_space<vmem>>) attributes {dimension_semantics = [], scalar_prefetch = 0 : i64, scratch_operands = 0 : i64, tpu.core_type = #tpu.core_type<tc>} {
    %c0 = arith.constant 0 : index
    %c0_0 = arith.constant 0 : index
    %c0_1 = arith.constant 0 : index
    %0 = vector.load %arg0[%c0, %c0_0, %c0_1] : memref<2x8x8xf32, #tpu.memory_space<vmem>>, vector<2x8x8xf32>
    %1 = vector.shape_cast %0 : vector<2x8x8xf32> to vector<16x8xf32>
    %2 = arith.truncf %1 : vector<16x8xf32> to vector<16x8xbf16>
    %c0_2 = arith.constant 0 : index
    %c0_3 = arith.constant 0 : index
    %3 = vector.load %arg2[%c0_2, %c0_3] : memref<8x32xbf16, #tpu.memory_space<vmem>>, vector<8x32xbf16>
    %cst = arith.constant dense<0.000000e+00> : vector<16x32xf32>
    %4 = tpu.matmul %2, %3, %cst {dimension_numbers = #tpu.dot_dimension_numbers<[1], [0], [0], [1], [0, 0, 1, 1], [], []>} : vector<16x8xbf16>, vector<8x32xbf16>, vector<16x32xf32> -> vector<16x32xf32>
    %c0_4 = arith.constant 0 : index
    %c0_5 = arith.constant 0 : index
    %5 = vector.load %arg4[%c0_4, %c0_5] : memref<1x32xf32, #tpu.memory_space<vmem>>, vector<1x32xf32>
    %6 = vector.broadcast %5 : vector<1x32xf32> to vector<16x32xf32>
    %7 = arith.addf %4, %6 : vector<16x32xf32>
    %8 = vector.shape_cast %7 : vector<16x32xf32> to vector<2x8x32xf32>
    %c0_6 = arith.constant 0 : index
    %c0_7 = arith.constant 0 : index
    %9 = vector.load %arg3[%c0_6, %c0_7] : memref<32x32xbf16, #tpu.memory_space<vmem>>, vector<32x32xbf16>
    %c0_8 = arith.constant 0 : index
    %c0_9 = arith.constant 0 : index
    %c0_10 = arith.constant 0 : index
    %10 = vector.load %arg1[%c0_8, %c0_9, %c0_10] : memref<1x2x32xf32, #tpu.memory_space<vmem>>, vector<1x2x32xf32>
    %11 = vector.shape_cast %10 : vector<1x2x32xf32> to vector<2x32xf32>
    %12 = vector.extract_strided_slice %8 {offsets = [0, 0, 0], sizes = [2, 1, 32], strides = [1, 1, 1]} : vector<2x8x32xf32> to vector<2x1x32xf32>
    %13 = vector.shape_cast %12 : vector<2x1x32xf32> to vector<2x32xf32>
    %14 = arith.truncf %11 : vector<2x32xf32> to vector<2x32xbf16>
    %cst_11 = arith.constant dense<0.000000e+00> : vector<2x32xf32>
    %15 = tpu.matmul %14, %9, %cst_11 {dimension_numbers = #tpu.dot_dimension_numbers<[1], [0], [0], [1], [0, 0, 1, 1], [], []>} : vector<2x32xbf16>, vector<32x32xbf16>, vector<2x32xf32> -> vector<2x32xf32>
    %16 = arith.addf %13, %15 : vector<2x32xf32>
    %17 = math.tanh %16 : vector<2x32xf32>
    %18 = vector.extract_strided_slice %8 {offsets = [0, 1, 0], sizes = [2, 1, 32], strides = [1, 1, 1]} : vector<2x8x32xf32> to vector<2x1x32xf32>
    %19 = vector.shape_cast %18 : vector<2x1x32xf32> to vector<2x32xf32>
    %20 = arith.truncf %17 : vector<2x32xf32> to vector<2x32xbf16>
    %cst_12 = arith.constant dense<0.000000e+00> : vector<2x32xf32>
    %21 = tpu.matmul %20, %9, %cst_12 {dimension_numbers = #tpu.dot_dimension_numbers<[1], [0], [0], [1], [0, 0, 1, 1], [], []>} : vector<2x32xbf16>, vector<32x32xbf16>, vector<2x32xf32> -> vector<2x32xf32>
    %22 = arith.addf %19, %21 : vector<2x32xf32>
    %23 = math.tanh %22 : vector<2x32xf32>
    %24 = vector.extract_strided_slice %8 {offsets = [0, 2, 0], sizes = [2, 1, 32], strides = [1, 1, 1]} : vector<2x8x32xf32> to vector<2x1x32xf32>
    %25 = vector.shape_cast %24 : vector<2x1x32xf32> to vector<2x32xf32>
    %26 = arith.truncf %23 : vector<2x32xf32> to vector<2x32xbf16>
    %cst_13 = arith.constant dense<0.000000e+00> : vector<2x32xf32>
    %27 = tpu.matmul %26, %9, %cst_13 {dimension_numbers = #tpu.dot_dimension_numbers<[1], [0], [0], [1], [0, 0, 1, 1], [], []>} : vector<2x32xbf16>, vector<32x32xbf16>, vector<2x32xf32> -> vector<2x32xf32>
    %28 = arith.addf %25, %27 : vector<2x32xf32>
    %29 = math.tanh %28 : vector<2x32xf32>
    %30 = vector.extract_strided_slice %8 {offsets = [0, 3, 0], sizes = [2, 1, 32], strides = [1, 1, 1]} : vector<2x8x32xf32> to vector<2x1x32xf32>
    %31 = vector.shape_cast %30 : vector<2x1x32xf32> to vector<2x32xf32>
    %32 = arith.truncf %29 : vector<2x32xf32> to vector<2x32xbf16>
    %cst_14 = arith.constant dense<0.000000e+00> : vector<2x32xf32>
    %33 = tpu.matmul %32, %9, %cst_14 {dimension_numbers = #tpu.dot_dimension_numbers<[1], [0], [0], [1], [0, 0, 1, 1], [], []>} : vector<2x32xbf16>, vector<32x32xbf16>, vector<2x32xf32> -> vector<2x32xf32>
    %34 = arith.addf %31, %33 : vector<2x32xf32>
    %35 = math.tanh %34 : vector<2x32xf32>
    %36 = vector.extract_strided_slice %8 {offsets = [0, 4, 0], sizes = [2, 1, 32], strides = [1, 1, 1]} : vector<2x8x32xf32> to vector<2x1x32xf32>
    %37 = vector.shape_cast %36 : vector<2x1x32xf32> to vector<2x32xf32>
    %38 = arith.truncf %35 : vector<2x32xf32> to vector<2x32xbf16>
    %cst_15 = arith.constant dense<0.000000e+00> : vector<2x32xf32>
    %39 = tpu.matmul %38, %9, %cst_15 {dimension_numbers = #tpu.dot_dimension_numbers<[1], [0], [0], [1], [0, 0, 1, 1], [], []>} : vector<2x32xbf16>, vector<32x32xbf16>, vector<2x32xf32> -> vector<2x32xf32>
    %40 = arith.addf %37, %39 : vector<2x32xf32>
    %41 = math.tanh %40 : vector<2x32xf32>
    %42 = vector.extract_strided_slice %8 {offsets = [0, 5, 0], sizes = [2, 1, 32], strides = [1, 1, 1]} : vector<2x8x32xf32> to vector<2x1x32xf32>
    %43 = vector.shape_cast %42 : vector<2x1x32xf32> to vector<2x32xf32>
    %44 = arith.truncf %41 : vector<2x32xf32> to vector<2x32xbf16>
    %cst_16 = arith.constant dense<0.000000e+00> : vector<2x32xf32>
    %45 = tpu.matmul %44, %9, %cst_16 {dimension_numbers = #tpu.dot_dimension_numbers<[1], [0], [0], [1], [0, 0, 1, 1], [], []>} : vector<2x32xbf16>, vector<32x32xbf16>, vector<2x32xf32> -> vector<2x32xf32>
    %46 = arith.addf %43, %45 : vector<2x32xf32>
    %47 = math.tanh %46 : vector<2x32xf32>
    %48 = vector.extract_strided_slice %8 {offsets = [0, 6, 0], sizes = [2, 1, 32], strides = [1, 1, 1]} : vector<2x8x32xf32> to vector<2x1x32xf32>
    %49 = vector.shape_cast %48 : vector<2x1x32xf32> to vector<2x32xf32>
    %50 = arith.truncf %47 : vector<2x32xf32> to vector<2x32xbf16>
    %cst_17 = arith.constant dense<0.000000e+00> : vector<2x32xf32>
    %51 = tpu.matmul %50, %9, %cst_17 {dimension_numbers = #tpu.dot_dimension_numbers<[1], [0], [0], [1], [0, 0, 1, 1], [], []>} : vector<2x32xbf16>, vector<32x32xbf16>, vector<2x32xf32> -> vector<2x32xf32>
    %52 = arith.addf %49, %51 : vector<2x32xf32>
    %53 = math.tanh %52 : vector<2x32xf32>
    %54 = vector.extract_strided_slice %8 {offsets = [0, 7, 0], sizes = [2, 1, 32], strides = [1, 1, 1]} : vector<2x8x32xf32> to vector<2x1x32xf32>
    %55 = vector.shape_cast %54 : vector<2x1x32xf32> to vector<2x32xf32>
    %56 = arith.truncf %53 : vector<2x32xf32> to vector<2x32xbf16>
    %cst_18 = arith.constant dense<0.000000e+00> : vector<2x32xf32>
    %57 = tpu.matmul %56, %9, %cst_18 {dimension_numbers = #tpu.dot_dimension_numbers<[1], [0], [0], [1], [0, 0, 1, 1], [], []>} : vector<2x32xbf16>, vector<32x32xbf16>, vector<2x32xf32> -> vector<2x32xf32>
    %58 = arith.addf %55, %57 : vector<2x32xf32>
    %59 = math.tanh %58 : vector<2x32xf32>
    %60 = arith.truncf %17 : vector<2x32xf32> to vector<2x32xbf16>
    %c0_19 = arith.constant 0 : index
    %c0_20 = arith.constant 0 : index
    %61 = vector.load %arg5[%c0_19, %c0_20] : memref<32x8xbf16, #tpu.memory_space<vmem>>, vector<32x8xbf16>
    %cst_21 = arith.constant dense<0.000000e+00> : vector<2x8xf32>
    %62 = tpu.matmul %60, %61, %cst_21 {dimension_numbers = #tpu.dot_dimension_numbers<[1], [0], [0], [1], [0, 0, 1, 1], [], []>} : vector<2x32xbf16>, vector<32x8xbf16>, vector<2x8xf32> -> vector<2x8xf32>
    %c0_22 = arith.constant 0 : index
    %c0_23 = arith.constant 0 : index
    %63 = vector.load %arg6[%c0_22, %c0_23] : memref<1x8xf32, #tpu.memory_space<vmem>>, vector<1x8xf32>
    %64 = vector.broadcast %63 : vector<1x8xf32> to vector<2x8xf32>
    %65 = arith.addf %62, %64 : vector<2x8xf32>
    %cst_24 = arith.constant 0.000000e+00 : f32
    %66 = vector.broadcast %cst_24 : f32 to vector<2x8xf32>
    %67 = arith.cmpf oge, %65, %66 : vector<2x8xf32>
    %cst_25 = arith.constant 0.00999999977 : f32
    %68 = vector.broadcast %cst_25 : f32 to vector<2x8xf32>
    %69 = arith.mulf %68, %65 : vector<2x8xf32>
    %70 = arith.select %67, %65, %69 : vector<2x8xi1>, vector<2x8xf32>
    %c0_26 = arith.constant 0 : index
    %c0_27 = arith.constant 0 : index
    %71 = vector.load %arg7[%c0_26, %c0_27] : memref<2x8xf32, #tpu.memory_space<vmem>>, vector<2x8xf32>
    tpu.vector_store %arg7[%c0_26, %c0_27], %70 {strides = array<i32>} : memref<2x8xf32, #tpu.memory_space<vmem>>, vector<2x8xf32>,
    %c0_28 = arith.constant 0 : index
    %c0_29 = arith.constant 0 : index
    %c0_30 = arith.constant 0 : index
    %72 = vector.load %arg8[%c0_28, %c0_29, %c0_30] : memref<1x2x32xf32, #tpu.memory_space<vmem>>, vector<1x2x32xf32>
    %73 = vector.shape_cast %72 : vector<1x2x32xf32> to vector<2x32xf32>
    %74 = vector.shape_cast %59 : vector<2x32xf32> to vector<1x2x32xf32>
    tpu.vector_store %arg8[%c0_28, %c0_29, %c0_30], %74 {strides = array<i32>} : memref<1x2x32xf32, #tpu.memory_space<vmem>>, vector<1x2x32xf32>,
    return
  }
}

</mosaic_0001>

<llo_original>
// kernel: rnn_core_forward.1
$region0: #{rnn_core_forward.1}
  #allocation0 [shape = 'u32[]', space=smem, size = 0x4, offset = 0x4, fixed_abs, tag = 'smem constant byte address 0x4 - core index']
  #allocation1 [shape = 'u32[144,128]{1,0:T(1,128)}', space=vmem, size = 0x12000, scoped, tag = 'internal scratch']
  %s0 = inlined_call_operand.vmem [shape: f32[2,8,8], index: 0, kind: input, shape index: {}]
  %s1 = inlined_call_operand.vmem [shape: f32[1,2,32], index: 1, kind: input, shape index: {}]
  %s2 = inlined_call_operand.vmem [shape: bf16[8,32], index: 2, kind: input, shape index: {}]
  %s3 = inlined_call_operand.vmem [shape: bf16[32,32], index: 3, kind: input, shape index: {}]
  %s4 = inlined_call_operand.hbm [shape: f32[1,32], index: 4, kind: input, shape index: {}]
  %s5 = inlined_call_operand.vmem [shape: bf16[32,8], index: 5, kind: input, shape index: {}]
  %s6 = inlined_call_operand.hbm [shape: f32[1,8], index: 6, kind: input, shape index: {}]
  %s7 = inlined_call_operand.hbm [shape: f32[2,8], index: 7, kind: output, shape index: {0}]
  %s8 = inlined_call_operand.hbm [shape: f32[1,2,32], index: 8, kind: output, shape index: {1}]
  %9 = xla_tuple %s7, %s8
  %s10 = sld [smem:[#allocation0]]
  $region54: #{rnn_core_forward.1} parent=0
    _
  %s12 = ssub.s32 1, %s10
  %s13 = scalar_select 0, %s12, %s10
  $region1: #{rnn_core_forward.1} parent=0
    #allocation2 [shape = 'u8[512]{0}', space=vmem, size = 0x400, scoped, tag = 'input window, operand 4, single buffered']
    #allocation3 [shape = 's32[1]{0}', space=sflag, size = 0x4, scoped, tag = 'scoped memory for rnn_core_forward.1']
    #allocation4 [shape = 's32[1]{0}', space=sflag, size = 0x4, scoped, tag = 'scoped memory for rnn_core_forward.1']
    #allocation5 [shape = 'u8[512]{0}', space=vmem, size = 0x400, scoped, tag = 'input window, operand 6, single buffered']
    #allocation6 [shape = 's32[1]{0}', space=sflag, size = 0x4, scoped, tag = 'scoped memory for rnn_core_forward.1']
    #allocation7 [shape = 'u8[1024]{0}', space=vmem, size = 0x400, scoped, tag = 'output window, operand 0, single buffered']
    #allocation8 [shape = 'u8[1024]{0}', space=vmem, size = 0x400, scoped, tag = 'output window, operand 1, single buffered']
    #allocation9 [shape = 's32[1]{0}', space=sflag, size = 0x4, scoped, tag = 'scoped memory for rnn_core_forward.1']
    %14 = vsyncpa [#allocation3], 0
    %15 = vsyncpa [#allocation6], 0
    %16 = vsyncpa [#allocation4], 0
    %17 = vsyncpa [#allocation9], 0
    // Predicated region
    $region2: #{rnn_core_forward.1} parent=1 // pred_check
      _
    $region3: #{rnn_core_forward.1} parent=1 // pred_check_branch
      %19 = sbr.rel (0) target = $region5
    $region4: #{rnn_core_forward.1} parent=1 // pred_region
      _
    $region5: #{rnn_core_forward.1} parent=1 // pred_fallthru
      _
    // Predicated region
    $region6: #{rnn_core_forward.1} parent=1 // pred_check
      _
    $region7: #{rnn_core_forward.1} parent=1 // pred_check_branch
      %21 = sbr.rel (0) target = $region9
    $region8: #{rnn_core_forward.1} parent=1 // pred_region
      _
    $region9: #{rnn_core_forward.1} parent=1 // pred_fallthru
      _
    // Predicated region
    $region10: #{rnn_core_forward.1} parent=1 // pred_check
      _
    $region11: #{rnn_core_forward.1} parent=1 // pred_check_branch
      %23 = sbr.rel (0) target = $region13
    $region12: #{rnn_core_forward.1} parent=1 // pred_region
      _
    $region13: #{rnn_core_forward.1} parent=1 // pred_fallthru
      _
    // Predicated region
    $region14: #{rnn_core_forward.1} parent=1 // pred_check
      _
    $region15: #{rnn_core_forward.1} parent=1 // pred_check_branch
      %25 = sbr.rel (0) target = $region17
    $region16: #{rnn_core_forward.1} parent=1 // pred_region
      _
    $region17: #{rnn_core_forward.1} parent=1 // pred_fallthru
      _
    // Predicated region
    $region18: #{rnn_core_forward.1} parent=1 // pred_check
      _
    $region19: #{rnn_core_forward.1} parent=1 // pred_check_branch
      %27 = sbr.rel (0) target = $region21
    $region20: #{rnn_core_forward.1} parent=1 // pred_region
      %s29 = ssub.s32 16, 16
      %30 = vsyncadd [#allocation3], %s29
      %s32 = sshll.u32 [#allocation2], 4
      %s33 = int_to_ptr.vmem [resolvable:$true] %s32
      %35 = dma.hbm_to_vmem [thread:$0]  %s4, 16, %s33, [#allocation3]
    $region21: #{rnn_core_forward.1} parent=1 // pred_fallthru
      _
    // Predicated region
    $region22: #{rnn_core_forward.1} parent=1 // pred_check
      _
    $region23: #{rnn_core_forward.1} parent=1 // pred_check_branch
      %37 = sbr.rel (0) target = $region25
    $region24: #{rnn_core_forward.1} parent=1 // pred_region
      _
    $region25: #{rnn_core_forward.1} parent=1 // pred_fallthru
      _
    // Predicated region
    $region26: #{rnn_core_forward.1} parent=1 // pred_check
      _
    $region27: #{rnn_core_forward.1} parent=1 // pred_check_branch
      %39 = sbr.rel (0) target = $region29
    $region28: #{rnn_core_forward.1} parent=1 // pred_region
      %s41 = ssub.s32 16, 16
      %42 = vsyncadd [#allocation6], %s41
      %s44 = sshll.u32 [#allocation5], 4
      %s45 = int_to_ptr.vmem [resolvable:$true] %s44
      %47 = dma.hbm_to_vmem [thread:$0]  %s6, 16, %s45, [#allocation6]
    $region29: #{rnn_core_forward.1} parent=1 // pred_fallthru
      _
    // Predicated region
    $region30: #{rnn_core_forward.1} parent=1 // pred_check
      _
    $region31: #{rnn_core_forward.1} parent=1 // pred_check_branch
      %49 = sbr.rel (0) target = $region33
    $region32: #{rnn_core_forward.1} parent=1 // pred_region
      %50 = dma.done [#allocation3], 16
    $region33: #{rnn_core_forward.1} parent=1 // pred_fallthru
      _
    // Predicated region
    $region34: #{rnn_core_forward.1} parent=1 // pred_check
      _
    $region35: #{rnn_core_forward.1} parent=1 // pred_check_branch
      %52 = sbr.rel (0) target = $region37
    $region36: #{rnn_core_forward.1} parent=1 // pred_region
      %53 = dma.done [#allocation6], 16
    $region37: #{rnn_core_forward.1} parent=1 // pred_fallthru
      _
    %v55 = vld [vmem:[%s0] sm:$0xff]
    %v56 = vld [vmem:[%s0 + $0x8] sm:$0xff]
    %v57 = vpack.c.bf16 %v56, %v55
    %v58 = vld [vmem:[%s2] sm:$0xf]
    %v59 = vld [vmem:[#allocation2] sm:$0x1]
    %v61 = vlaneseq
    %v62 = vshrl.u32 %v61, 7
    %v63 = vsub.s32 0, %v62
    %v64 = vrot.slane %v59, %v63
    %vm66 = vcmask 64512
    %v68 = vsel %vm66, %v57, 0
    %vm70 = vcmask 1043456
    %v72 = vsel %vm70, %v58, 0
    %74 = vmatprep.subr.bf16.mxu0 0
    %75 = vmatpush1.bf16.msra.mxu0 %v72
    %76 = vmatprep.subr.bf16.mxu0 0
    %77 = vmatpush1.bf16.msra.mxu0 0
    %78 = vmatprep.subr.bf16.mxu0 0
    %79 = vmatpush1.bf16.msra.mxu0 0
    %80 = vmatprep.subr.bf16.mxu0 0
    %81 = vmatpush1.bf16.msra.mxu0 0
    %82 = vmatprep.subr.bf16.mxu0 0
    %83 = vmatpush1.bf16.msra.mxu0 0
    %84 = vmatprep.subr.bf16.mxu0 0
    %85 = vmatpush1.bf16.msra.mxu0 0
    %86 = vmatprep.subr.bf16.mxu0 0
    %87 = vmatpush1.bf16.msra.mxu0 0
    %88 = vmatprep.subr.bf16.mxu0 0
    %89 = vmatpush1.bf16.msra.mxu0 0
    %90 = vmatprep.subr.bf16.mxu0 0
    %91 = vmatpush1.bf16.msra.mxu0 0
    %92 = vmatprep.subr.bf16.mxu0 0
    %93 = vmatpush1.bf16.msra.mxu0 0
    %94 = vmatprep.subr.bf16.mxu0 0
    %95 = vmatpush1.bf16.msra.mxu0 0
    %96 = vmatprep.subr.bf16.mxu0 0
    %97 = vmatpush1.bf16.msra.mxu0 0
    %98 = vmatprep.subr.bf16.mxu0 0
    %99 = vmatpush1.bf16.msra.mxu0 0
    %100 = vmatprep.subr.bf16.mxu0 0
    %101 = vmatpush1.bf16.msra.mxu0 0
    %102 = vmatprep.subr.bf16.mxu0 0
    %103 = vmatpush1.bf16.msra.mxu0 0
    %104 = vmatprep.subr.bf16.mxu0 0
    %105 = vmatpush1.bf16.msra.mxu0 0
    %106 = vmatprep.mubr.bf16.mxu0 0
    %107 = vmatmul.mubr.bf16.gmra.mrb[0].mxu0 %v68
    %v108 = vpop.f32.mrb[0].mxu0
    %v109 = vadd.f32 %v64, %v108
    %v110 = vpop.f32.mrb[0].mxu0
    %v111 = vpop.f32.mrb[0].mxu0
    %v112 = vadd.f32 %v64, %v111
    %v113 = vpop.f32.mrb[0].mxu0
    %114 = vdwg.mxu0
    %v115 = vld [vmem:[%s3] sm:$0xf]
    %v116 = vld [vmem:[%s3 + $0x4] sm:$0xf]
    %v117 = vld [vmem:[%s3 + $0x8] sm:$0xf]
    %v118 = vld [vmem:[%s3 + $0xc] sm:$0xf]
    %v119 = vld [vmem:[%s1] sm:$0x3]
    %v120 = vpack.c.bf16 %v119, %v119
    %v125 = vunpack.c.l.b16 %v115
    %v126 = vunpack.c.l.b16 %v116
    %v127 = vunpack.c.l.b16 %v117
    %v128 = vunpack.c.l.b16 %v118
    %v129 = vpack.c.b16 %v126, %v125
    %v130 = vpack.c.b16 %v128, %v127
    %vm133 = vcmask 261120
    %v135 = vsel %vm133, %v120, 0
    %137 = vmatprep.subr.bf16.mxu0 0
    %138 = vmatpush1.bf16.msra.mxu0 %v129
    %139 = vmatprep.subr.bf16.mxu0 0
    %140 = vmatpush1.bf16.msra.mxu0 %v130
    %141 = vmatprep.subr.bf16.mxu0 0
    %142 = vmatpush1.bf16.msra.mxu0 0
    %143 = vmatprep.subr.bf16.mxu0 0
    %144 = vmatpush1.bf16.msra.mxu0 0
    %145 = vmatprep.subr.bf16.mxu0 0
    %146 = vmatpush1.bf16.msra.mxu0 0
    %147 = vmatprep.subr.bf16.mxu0 0
    %148 = vmatpush1.bf16.msra.mxu0 0
    %149 = vmatprep.subr.bf16.mxu0 0
    %150 = vmatpush1.bf16.msra.mxu0 0
    %151 = vmatprep.subr.bf16.mxu0 0
    %152 = vmatpush1.bf16.msra.mxu0 0
    %153 = vmatprep.subr.bf16.mxu0 0
    %154 = vmatpush1.bf16.msra.mxu0 0
    %155 = vmatprep.subr.bf16.mxu0 0
    %156 = vmatpush1.bf16.msra.mxu0 0
    %157 = vmatprep.subr.bf16.mxu0 0
    %158 = vmatpush1.bf16.msra.mxu0 0
    %159 = vmatprep.subr.bf16.mxu0 0
    %160 = vmatpush1.bf16.msra.mxu0 0
    %161 = vmatprep.subr.bf16.mxu0 0
    %162 = vmatpush1.bf16.msra.mxu0 0
    %163 = vmatprep.subr.bf16.mxu0 0
    %164 = vmatpush1.bf16.msra.mxu0 0
    %165 = vmatprep.subr.bf16.mxu0 0
    %166 = vmatpush1.bf16.msra.mxu0 0
    %167 = vmatprep.subr.bf16.mxu0 0
    %168 = vmatpush1.bf16.msra.mxu0 0
    %169 = vmatprep.mubr.bf16.mxu0 0
    %170 = vmatmul.mubr.bf16.gmra.mrb[0].mxu0 %v135
    %v171 = vpop.f32.mrb[0].mxu0
    %v172 = vadd.f32 0.0, %v171
    %v173 = vpop.f32.mrb[0].mxu0
    %v174 = vpop.f32.mrb[0].mxu0
    %v175 = vpop.f32.mrb[0].mxu0
    %176 = vdwg.mxu0
    %v178 = vrot.slane %v172, 1
    %v181 = vadd.f32 %v109, %v172
    %v182 = vadd.f32 %v112, %v178
    %v183 = vtanh.pop %v181
    %v184 = vtanh.pop %v182
    %v185 = vpack.c.bf16 %v183, %v183
    %v186 = vpack.c.bf16 %v184, %v184
    %v189 = vunpack.c.l.b16 %v185
    %v190 = vunpack.c.l.b16 %v186
    %v191 = vrot.slane %v190, 7
    %vm192 = vcmask 1041409
    %v193 = vsel %vm192, %v191, %v189
    %v194 = vpack.c.b16 %v193, %v193
    %v196 = vsel %vm133, %v194, 0
    %198 = vmatprep.subr.bf16.mxu0 0
    %199 = vmatpush1.bf16.msra.mxu0 %v129
    %200 = vmatprep.subr.bf16.mxu0 0
    %201 = vmatpush1.bf16.msra.mxu0 %v130
    %202 = vmatprep.subr.bf16.mxu0 0
    %203 = vmatpush1.bf16.msra.mxu0 0
    %204 = vmatprep.subr.bf16.mxu0 0
    %205 = vmatpush1.bf16.msra.mxu0 0
    %206 = vmatprep.subr.bf16.mxu0 0
    %207 = vmatpush1.bf16.msra.mxu0 0
    %208 = vmatprep.subr.bf16.mxu0 0
    %209 = vmatpush1.bf16.msra.mxu0 0
    %210 = vmatprep.subr.bf16.mxu0 0
    %211 = vmatpush1.bf16.msra.mxu0 0
    %212 = vmatprep.subr.bf16.mxu0 0
    %213 = vmatpush1.bf16.msra.mxu0 0
    %214 = vmatprep.subr.bf16.mxu0 0
    %215 = vmatpush1.bf16.msra.mxu0 0
    %216 = vmatprep.subr.bf16.mxu0 0
    %217 = vmatpush1.bf16.msra.mxu0 0
    %218 = vmatprep.subr.bf16.mxu0 0
    %219 = vmatpush1.bf16.msra.mxu0 0
    %220 = vmatprep.subr.bf16.mxu0 0
    %221 = vmatpush1.bf16.msra.mxu0 0
    %222 = vmatprep.subr.bf16.mxu0 0
    %223 = vmatpush1.bf16.msra.mxu0 0
    %224 = vmatprep.subr.bf16.mxu0 0
    %225 = vmatpush1.bf16.msra.mxu0 0
    %226 = vmatprep.subr.bf16.mxu0 0
    %227 = vmatpush1.bf16.msra.mxu0 0
    %228 = vmatprep.subr.bf16.mxu0 0
    %229 = vmatpush1.bf16.msra.mxu0 0
    %230 = vmatprep.mubr.bf16.mxu0 0
    %231 = vmatmul.mubr.bf16.gmra.mrb[0].mxu0 %v196
    %v232 = vpop.f32.mrb[0].mxu0
    %v233 = vadd.f32 0.0, %v232
    %v234 = vpop.f32.mrb[0].mxu0
    %v235 = vpop.f32.mrb[0].mxu0
    %v236 = vpop.f32.mrb[0].mxu0
    %237 = vdwg.mxu0
    %v239 = vrot.slane %v233, 7
    %v242 = vadd.f32 %v109, %v239
    %v243 = vadd.f32 %v112, %v233
    %v244 = vtanh.pop %v242
    %v245 = vtanh.pop %v243
    %v246 = vpack.c.bf16 %v244, %v244
    %v247 = vpack.c.bf16 %v245, %v245
    %v250 = vunpack.c.l.b16 %v246
    %v251 = vunpack.c.l.b16 %v247
    %v252 = vrot.slane %v250, 1
    %v253 = vsel %vm192, %v251, %v252
    %v254 = vpack.c.b16 %v253, %v253
    %v256 = vsel %vm133, %v254, 0
    %258 = vmatprep.subr.bf16.mxu0 0
    %259 = vmatpush1.bf16.msra.mxu0 %v129
    %260 = vmatprep.subr.bf16.mxu0 0
    %261 = vmatpush1.bf16.msra.mxu0 %v130
    %262 = vmatprep.subr.bf16.mxu0 0
    %263 = vmatpush1.bf16.msra.mxu0 0
    %264 = vmatprep.subr.bf16.mxu0 0
    %265 = vmatpush1.bf16.msra.mxu0 0
    %266 = vmatprep.subr.bf16.mxu0 0
    %267 = vmatpush1.bf16.msra.mxu0 0
    %268 = vmatprep.subr.bf16.mxu0 0
    %269 = vmatpush1.bf16.msra.mxu0 0
    %270 = vmatprep.subr.bf16.mxu0 0
    %271 = vmatpush1.bf16.msra.mxu0 0
    %272 = vmatprep.subr.bf16.mxu0 0
    %273 = vmatpush1.bf16.msra.mxu0 0
    %274 = vmatprep.subr.bf16.mxu0 0
    %275 = vmatpush1.bf16.msra.mxu0 0
    %276 = vmatprep.subr.bf16.mxu0 0
    %277 = vmatpush1.bf16.msra.mxu0 0
    %278 = vmatprep.subr.bf16.mxu0 0
    %279 = vmatpush1.bf16.msra.mxu0 0
    %280 = vmatprep.subr.bf16.mxu0 0
    %281 = vmatpush1.bf16.msra.mxu0 0
    %282 = vmatprep.subr.bf16.mxu0 0
    %283 = vmatpush1.bf16.msra.mxu0 0
    %284 = vmatprep.subr.bf16.mxu0 0
    %285 = vmatpush1.bf16.msra.mxu0 0
    %286 = vmatprep.subr.bf16.mxu0 0
    %287 = vmatpush1.bf16.msra.mxu0 0
    %288 = vmatprep.subr.bf16.mxu0 0
    %289 = vmatpush1.bf16.msra.mxu0 0
    %290 = vmatprep.mubr.bf16.mxu0 0
    %291 = vmatmul.mubr.bf16.gmra.mrb[0].mxu0 %v256
    %v292 = vpop.f32.mrb[0].mxu0
    %v293 = vadd.f32 0.0, %v292
    %v294 = vpop.f32.mrb[0].mxu0
    %v295 = vpop.f32.mrb[0].mxu0
    %v296 = vpop.f32.mrb[0].mxu0
    %297 = vdwg.mxu0
    %v299 = vrot.slane %v293, 6
    %v300 = vrot.slane %v293, 7
    %v303 = vadd.f32 %v109, %v299
    %v304 = vadd.f32 %v112, %v300
    %v305 = vtanh.pop %v303
    %v306 = vtanh.pop %v304
    %v307 = vpack.c.bf16 %v305, %v305
    %v308 = vpack.c.bf16 %v306, %v306
    %v311 = vunpack.c.l.b16 %v307
    %v312 = vunpack.c.l.b16 %v308
    %v313 = vrot.slane %v311, 2
    %v314 = vrot.slane %v312, 1
    %v315 = vsel %vm192, %v314, %v313
    %v316 = vpack.c.b16 %v315, %v315
    %v318 = vsel %vm133, %v316, 0
    %320 = vmatprep.subr.bf16.mxu0 0
    %321 = vmatpush1.bf16.msra.mxu0 %v129
    %322 = vmatprep.subr.bf16.mxu0 0
    %323 = vmatpush1.bf16.msra.mxu0 %v130
    %324 = vmatprep.subr.bf16.mxu0 0
    %325 = vmatpush1.bf16.msra.mxu0 0
    %326 = vmatprep.subr.bf16.mxu0 0
    %327 = vmatpush1.bf16.msra.mxu0 0
    %328 = vmatprep.subr.bf16.mxu0 0
    %329 = vmatpush1.bf16.msra.mxu0 0
    %330 = vmatprep.subr.bf16.mxu0 0
    %331 = vmatpush1.bf16.msra.mxu0 0
    %332 = vmatprep.subr.bf16.mxu0 0
    %333 = vmatpush1.bf16.msra.mxu0 0
    %334 = vmatprep.subr.bf16.mxu0 0
    %335 = vmatpush1.bf16.msra.mxu0 0
    %336 = vmatprep.subr.bf16.mxu0 0
    %337 = vmatpush1.bf16.msra.mxu0 0
    %338 = vmatprep.subr.bf16.mxu0 0
    %339 = vmatpush1.bf16.msra.mxu0 0
    %340 = vmatprep.subr.bf16.mxu0 0
    %341 = vmatpush1.bf16.msra.mxu0 0
    %342 = vmatprep.subr.bf16.mxu0 0
    %343 = vmatpush1.bf16.msra.mxu0 0
    %344 = vmatprep.subr.bf16.mxu0 0
    %345 = vmatpush1.bf16.msra.mxu0 0
    %346 = vmatprep.subr.bf16.mxu0 0
    %347 = vmatpush1.bf16.msra.mxu0 0
    %348 = vmatprep.subr.bf16.mxu0 0
    %349 = vmatpush1.bf16.msra.mxu0 0
    %350 = vmatprep.subr.bf16.mxu0 0
    %351 = vmatpush1.bf16.msra.mxu0 0
    %352 = vmatprep.mubr.bf16.mxu0 0
    %353 = vmatmul.mubr.bf16.gmra.mrb[0].mxu0 %v318
    %v354 = vpop.f32.mrb[0].mxu0
    %v355 = vadd.f32 0.0, %v354
    %v356 = vpop.f32.mrb[0].mxu0
    %v357 = vpop.f32.mrb[0].mxu0
    %v358 = vpop.f32.mrb[0].mxu0
    %359 = vdwg.mxu0
    %v361 = vrot.slane %v355, 5
    %v362 = vrot.slane %v355, 6
    %v365 = vadd.f32 %v109, %v361
    %v366 = vadd.f32 %v112, %v362
    %v367 = vtanh.pop %v365
    %v368 = vtanh.pop %v366
    %v369 = vpack.c.bf16 %v367, %v367
    %v370 = vpack.c.bf16 %v368, %v368
    %v373 = vunpack.c.l.b16 %v369
    %v374 = vunpack.c.l.b16 %v370
    %v375 = vrot.slane %v373, 3
    %v376 = vrot.slane %v374, 2
    %v377 = vsel %vm192, %v376, %v375
    %v378 = vpack.c.b16 %v377, %v377
    %v380 = vsel %vm133, %v378, 0
    %382 = vmatprep.subr.bf16.mxu0 0
    %383 = vmatpush1.bf16.msra.mxu0 %v129
    %384 = vmatprep.subr.bf16.mxu0 0
    %385 = vmatpush1.bf16.msra.mxu0 %v130
    %386 = vmatprep.subr.bf16.mxu0 0
    %387 = vmatpush1.bf16.msra.mxu0 0
    %388 = vmatprep.subr.bf16.mxu0 0
    %389 = vmatpush1.bf16.msra.mxu0 0
    %390 = vmatprep.subr.bf16.mxu0 0
    %391 = vmatpush1.bf16.msra.mxu0 0
    %392 = vmatprep.subr.bf16.mxu0 0
    %393 = vmatpush1.bf16.msra.mxu0 0
    %394 = vmatprep.subr.bf16.mxu0 0
    %395 = vmatpush1.bf16.msra.mxu0 0
    %396 = vmatprep.subr.bf16.mxu0 0
    %397 = vmatpush1.bf16.msra.mxu0 0
    %398 = vmatprep.subr.bf16.mxu0 0
    %399 = vmatpush1.bf16.msra.mxu0 0
    %400 = vmatprep.subr.bf16.mxu0 0
    %401 = vmatpush1.bf16.msra.mxu0 0
    %402 = vmatprep.subr.bf16.mxu0 0
    %403 = vmatpush1.bf16.msra.mxu0 0
    %404 = vmatprep.subr.bf16.mxu0 0
    %405 = vmatpush1.bf16.msra.mxu0 0
    %406 = vmatprep.subr.bf16.mxu0 0
    %407 = vmatpush1.bf16.msra.mxu0 0
    %408 = vmatprep.subr.bf16.mxu0 0
    %409 = vmatpush1.bf16.msra.mxu0 0
    %410 = vmatprep.subr.bf16.mxu0 0
    %411 = vmatpush1.bf16.msra.mxu0 0
    %412 = vmatprep.subr.bf16.mxu0 0
    %413 = vmatpush1.bf16.msra.mxu0 0
    %414 = vmatprep.mubr.bf16.mxu0 0
    %415 = vmatmul.mubr.bf16.gmra.mrb[0].mxu0 %v380
    %v416 = vpop.f32.mrb[0].mxu0
    %v417 = vadd.f32 0.0, %v416
    %v418 = vpop.f32.mrb[0].mxu0
    %v419 = vpop.f32.mrb[0].mxu0
    %v420 = vpop.f32.mrb[0].mxu0
    %421 = vdwg.mxu0
    %v423 = vrot.slane %v417, 4
    %v424 = vrot.slane %v417, 5
    %v427 = vadd.f32 %v109, %v423
    %v428 = vadd.f32 %v112, %v424
    %v429 = vtanh.pop %v427
    %v430 = vtanh.pop %v428
    %v431 = vpack.c.bf16 %v429, %v429
    %v432 = vpack.c.bf16 %v430, %v430
    %v435 = vunpack.c.l.b16 %v431
    %v436 = vunpack.c.l.b16 %v432
    %v437 = vrot.slane %v435, 4
    %v438 = vrot.slane %v436, 3
    %v439 = vsel %vm192, %v438, %v437
    %v440 = vpack.c.b16 %v439, %v439
    %v442 = vsel %vm133, %v440, 0
    %444 = vmatprep.subr.bf16.mxu0 0
    %445 = vmatpush1.bf16.msra.mxu0 %v129
    %446 = vmatprep.subr.bf16.mxu0 0
    %447 = vmatpush1.bf16.msra.mxu0 %v130
    %448 = vmatprep.subr.bf16.mxu0 0
    %449 = vmatpush1.bf16.msra.mxu0 0
    %450 = vmatprep.subr.bf16.mxu0 0
    %451 = vmatpush1.bf16.msra.mxu0 0
    %452 = vmatprep.subr.bf16.mxu0 0
    %453 = vmatpush1.bf16.msra.mxu0 0
    %454 = vmatprep.subr.bf16.mxu0 0
    %455 = vmatpush1.bf16.msra.mxu0 0
    %456 = vmatprep.subr.bf16.mxu0 0
    %457 = vmatpush1.bf16.msra.mxu0 0
    %458 = vmatprep.subr.bf16.mxu0 0
    %459 = vmatpush1.bf16.msra.mxu0 0
    %460 = vmatprep.subr.bf16.mxu0 0
    %461 = vmatpush1.bf16.msra.mxu0 0
    %462 = vmatprep.subr.bf16.mxu0 0
    %463 = vmatpush1.bf16.msra.mxu0 0
    %464 = vmatprep.subr.bf16.mxu0 0
    %465 = vmatpush1.bf16.msra.mxu0 0
    %466 = vmatprep.subr.bf16.mxu0 0
    %467 = vmatpush1.bf16.msra.mxu0 0
    %468 = vmatprep.subr.bf16.mxu0 0
    %469 = vmatpush1.bf16.msra.mxu0 0
    %470 = vmatprep.subr.bf16.mxu0 0
    %471 = vmatpush1.bf16.msra.mxu0 0
    %472 = vmatprep.subr.bf16.mxu0 0
    %473 = vmatpush1.bf16.msra.mxu0 0
    %474 = vmatprep.subr.bf16.mxu0 0
    %475 = vmatpush1.bf16.msra.mxu0 0
    %476 = vmatprep.mubr.bf16.mxu0 0
    %477 = vmatmul.mubr.bf16.gmra.mrb[0].mxu0 %v442
    %v478 = vpop.f32.mrb[0].mxu0
    %v479 = vadd.f32 0.0, %v478
    %v480 = vpop.f32.mrb[0].mxu0
    %v481 = vpop.f32.mrb[0].mxu0
    %v482 = vpop.f32.mrb[0].mxu0
    %483 = vdwg.mxu0
    %v485 = vrot.slane %v479, 3
    %v486 = vrot.slane %v479, 4
    %v489 = vadd.f32 %v109, %v485
    %v490 = vadd.f32 %v112, %v486
    %v491 = vtanh.pop %v489
    %v492 = vtanh.pop %v490
    %v493 = vpack.c.bf16 %v491, %v491
    %v494 = vpack.c.bf16 %v492, %v492
    %v497 = vunpack.c.l.b16 %v493
    %v498 = vunpack.c.l.b16 %v494
    %v499 = vrot.slane %v497, 5
    %v500 = vrot.slane %v498, 4
    %v501 = vsel %vm192, %v500, %v499
    %v502 = vpack.c.b16 %v501, %v501
    %v504 = vsel %vm133, %v502, 0
    %506 = vmatprep.subr.bf16.mxu0 0
    %507 = vmatpush1.bf16.msra.mxu0 %v129
    %508 = vmatprep.subr.bf16.mxu0 0
    %509 = vmatpush1.bf16.msra.mxu0 %v130
    %510 = vmatprep.subr.bf16.mxu0 0
    %511 = vmatpush1.bf16.msra.mxu0 0
    %512 = vmatprep.subr.bf16.mxu0 0
    %513 = vmatpush1.bf16.msra.mxu0 0
    %514 = vmatprep.subr.bf16.mxu0 0
    %515 = vmatpush1.bf16.msra.mxu0 0
    %516 = vmatprep.subr.bf16.mxu0 0
    %517 = vmatpush1.bf16.msra.mxu0 0
    %518 = vmatprep.subr.bf16.mxu0 0
    %519 = vmatpush1.bf16.msra.mxu0 0
    %520 = vmatprep.subr.bf16.mxu0 0
    %521 = vmatpush1.bf16.msra.mxu0 0
    %522 = vmatprep.subr.bf16.mxu0 0
    %523 = vmatpush1.bf16.msra.mxu0 0
    %524 = vmatprep.subr.bf16.mxu0 0
    %525 = vmatpush1.bf16.msra.mxu0 0
    %526 = vmatprep.subr.bf16.mxu0 0
    %527 = vmatpush1.bf16.msra.mxu0 0
    %528 = vmatprep.subr.bf16.mxu0 0
    %529 = vmatpush1.bf16.msra.mxu0 0
    %530 = vmatprep.subr.bf16.mxu0 0
    %531 = vmatpush1.bf16.msra.mxu0 0
    %532 = vmatprep.subr.bf16.mxu0 0
    %533 = vmatpush1.bf16.msra.mxu0 0
    %534 = vmatprep.subr.bf16.mxu0 0
    %535 = vmatpush1.bf16.msra.mxu0 0
    %536 = vmatprep.subr.bf16.mxu0 0
    %537 = vmatpush1.bf16.msra.mxu0 0
    %538 = vmatprep.mubr.bf16.mxu0 0
    %539 = vmatmul.mubr.bf16.gmra.mrb[0].mxu0 %v504
    %v540 = vpop.f32.mrb[0].mxu0
    %v541 = vadd.f32 0.0, %v540
    %v542 = vpop.f32.mrb[0].mxu0
    %v543 = vpop.f32.mrb[0].mxu0
    %v544 = vpop.f32.mrb[0].mxu0
    %545 = vdwg.mxu0
    %v547 = vrot.slane %v541, 2
    %v548 = vrot.slane %v541, 3
    %v551 = vadd.f32 %v109, %v547
    %v552 = vadd.f32 %v112, %v548
    %v553 = vtanh.pop %v551
    %v554 = vtanh.pop %v552
    %v555 = vpack.c.bf16 %v553, %v553
    %v556 = vpack.c.bf16 %v554, %v554
    %v559 = vunpack.c.l.b16 %v555
    %v560 = vunpack.c.l.b16 %v556
    %v561 = vrot.slane %v559, 6
    %v562 = vrot.slane %v560, 5
    %v563 = vsel %vm192, %v562, %v561
    %v564 = vpack.c.b16 %v563, %v563
    %v566 = vsel %vm133, %v564, 0
    %568 = vmatprep.subr.bf16.mxu0 0
    %569 = vmatpush1.bf16.msra.mxu0 %v129
    %570 = vmatprep.subr.bf16.mxu0 0
    %571 = vmatpush1.bf16.msra.mxu0 %v130
    %572 = vmatprep.subr.bf16.mxu0 0
    %573 = vmatpush1.bf16.msra.mxu0 0
    %574 = vmatprep.subr.bf16.mxu0 0
    %575 = vmatpush1.bf16.msra.mxu0 0
    %576 = vmatprep.subr.bf16.mxu0 0
    %577 = vmatpush1.bf16.msra.mxu0 0
    %578 = vmatprep.subr.bf16.mxu0 0
    %579 = vmatpush1.bf16.msra.mxu0 0
    %580 = vmatprep.subr.bf16.mxu0 0
    %581 = vmatpush1.bf16.msra.mxu0 0
    %582 = vmatprep.subr.bf16.mxu0 0
    %583 = vmatpush1.bf16.msra.mxu0 0
    %584 = vmatprep.subr.bf16.mxu0 0
    %585 = vmatpush1.bf16.msra.mxu0 0
    %586 = vmatprep.subr.bf16.mxu0 0
    %587 = vmatpush1.bf16.msra.mxu0 0
    %588 = vmatprep.subr.bf16.mxu0 0
    %589 = vmatpush1.bf16.msra.mxu0 0
    %590 = vmatprep.subr.bf16.mxu0 0
    %591 = vmatpush1.bf16.msra.mxu0 0
    %592 = vmatprep.subr.bf16.mxu0 0
    %593 = vmatpush1.bf16.msra.mxu0 0
    %594 = vmatprep.subr.bf16.mxu0 0
    %595 = vmatpush1.bf16.msra.mxu0 0
    %596 = vmatprep.subr.bf16.mxu0 0
    %597 = vmatpush1.bf16.msra.mxu0 0
    %598 = vmatprep.subr.bf16.mxu0 0
    %599 = vmatpush1.bf16.msra.mxu0 0
    %600 = vmatprep.mubr.bf16.mxu0 0
    %601 = vmatmul.mubr.bf16.gmra.mrb[0].mxu0 %v566
    %v602 = vpop.f32.mrb[0].mxu0
    %v603 = vadd.f32 0.0, %v602
    %v604 = vpop.f32.mrb[0].mxu0
    %v605 = vpop.f32.mrb[0].mxu0
    %v606 = vpop.f32.mrb[0].mxu0
    %607 = vdwg.mxu0
    %v609 = vrot.slane %v603, 1
    %v610 = vrot.slane %v603, 2
    %v613 = vadd.f32 %v109, %v609
    %v614 = vadd.f32 %v112, %v610
    %v615 = vtanh.pop %v613
    %v616 = vtanh.pop %v614
    %v617 = vld [vmem:[%s5] sm:$0xf]
    %v618 = vld [vmem:[%s5 + $0x4] sm:$0xf]
    %v619 = vld [vmem:[%s5 + $0x8] sm:$0xf]
    %v620 = vld [vmem:[%s5 + $0xc] sm:$0xf]
    %v621 = vld [vmem:[#allocation5] sm:$0x1]
    %v623 = vlaneseq
    %v624 = vshrl.u32 %v623, 7
    %v625 = vsub.s32 0, %v624
    %v626 = vrot.slane %v621, %v625
    %v632 = vunpack.c.l.b16 %v617
    %v633 = vunpack.c.l.b16 %v618
    %v634 = vunpack.c.l.b16 %v619
    %v635 = vunpack.c.l.b16 %v620
    %v636 = vpack.c.b16 %v633, %v632
    %v637 = vpack.c.b16 %v635, %v634
    %640 = vmatprep.subr.bf16.mxu0 0
    %641 = vmatpush1.bf16.msra.mxu0 %v636
    %642 = vmatprep.subr.bf16.mxu0 0
    %643 = vmatpush1.bf16.msra.mxu0 %v637
    %644 = vmatprep.subr.bf16.mxu0 0
    %645 = vmatpush1.bf16.msra.mxu0 0
    %646 = vmatprep.subr.bf16.mxu0 0
    %647 = vmatpush1.bf16.msra.mxu0 0
    %648 = vmatprep.subr.bf16.mxu0 0
    %649 = vmatpush1.bf16.msra.mxu0 0
    %650 = vmatprep.subr.bf16.mxu0 0
    %651 = vmatpush1.bf16.msra.mxu0 0
    %652 = vmatprep.subr.bf16.mxu0 0
    %653 = vmatpush1.bf16.msra.mxu0 0
    %654 = vmatprep.subr.bf16.mxu0 0
    %655 = vmatpush1.bf16.msra.mxu0 0
    %656 = vmatprep.subr.bf16.mxu0 0
    %657 = vmatpush1.bf16.msra.mxu0 0
    %658 = vmatprep.subr.bf16.mxu0 0
    %659 = vmatpush1.bf16.msra.mxu0 0
    %660 = vmatprep.subr.bf16.mxu0 0
    %661 = vmatpush1.bf16.msra.mxu0 0
    %662 = vmatprep.subr.bf16.mxu0 0
    %663 = vmatpush1.bf16.msra.mxu0 0
    %664 = vmatprep.subr.bf16.mxu0 0
    %665 = vmatpush1.bf16.msra.mxu0 0
    %666 = vmatprep.subr.bf16.mxu0 0
    %667 = vmatpush1.bf16.msra.mxu0 0
    %668 = vmatprep.subr.bf16.mxu0 0
    %669 = vmatpush1.bf16.msra.mxu0 0
    %670 = vmatprep.subr.bf16.mxu0 0
    %671 = vmatpush1.bf16.msra.mxu0 0
    %672 = vmatprep.mubr.bf16.mxu0 0
    %673 = vmatmul.mubr.bf16.gmra.mrb[0].mxu0 %v196
    %v674 = vpop.f32.mrb[0].mxu0
    %v675 = vadd.f32 %v626, %v674
    %v676 = vpop.f32.mrb[0].mxu0
    %v677 = vpop.f32.mrb[0].mxu0
    %v678 = vpop.f32.mrb[0].mxu0
    %679 = vdwg.mxu0
    %vm680 = vcmp.ge.f32.partialorder %v675, 0.0
    %v681 = vmul.f32 %v675, 0.01
    %v682 = vsel %vm680, %v675, %v681
    %vm683 = vcmask 58368
    %684 = vst.msk [vmem:[#allocation7] sm:$0x3] %vm683, %v682
    %v687 = vrot.slane %v616, 7
    %vm690 = vcmask 261127
    %691 = vst.msk [vmem:[#allocation8 - $0x7] sm:$0x80] %vm690, %v615
    %vm692 = vcmask 253952
    %693 = vst.msk [vmem:[#allocation8 + $0x1] sm:$0x1] %vm692, %v687
    // Predicated region
    $region38: #{rnn_core_forward.1} parent=1 // pred_check
      _
    $region39: #{rnn_core_forward.1} parent=1 // pred_check_branch
      %695 = sbr.rel (0) target = $region41
    $region40: #{rnn_core_forward.1} parent=1 // pred_region
      %s697 = ssub.s32 32, 32
      %698 = vsyncadd [#allocation4], %s697
      %s700 = sshll.u32 [#allocation7], 4
      %s701 = int_to_ptr.vmem [resolvable:$true] %s700
      %703 = dma.vmem_to_hbm [thread:$0]  %s701, 32, %s7, [#allocation4]
    $region41: #{rnn_core_forward.1} parent=1 // pred_fallthru
      _
    // Predicated region
    $region42: #{rnn_core_forward.1} parent=1 // pred_check
      _
    $region43: #{rnn_core_forward.1} parent=1 // pred_check_branch
      %705 = sbr.rel (0) target = $region45
    $region44: #{rnn_core_forward.1} parent=1 // pred_region
      %s707 = ssub.s32 32, 32
      %708 = vsyncadd [#allocation9], %s707
      %s710 = sshll.u32 [#allocation8], 4
      %s711 = int_to_ptr.vmem [resolvable:$true] %s710
      %713 = dma.vmem_to_hbm [thread:$0]  %s711, 32, %s8, [#allocation9]
    $region45: #{rnn_core_forward.1} parent=1 // pred_fallthru
      _
    // Predicated region
    $region46: #{rnn_core_forward.1} parent=1 // pred_check
      _
    $region47: #{rnn_core_forward.1} parent=1 // pred_check_branch
      %715 = sbr.rel (0) target = $region49
    $region48: #{rnn_core_forward.1} parent=1 // pred_region
      %716 = dma.done [#allocation4], 32
    $region49: #{rnn_core_forward.1} parent=1 // pred_fallthru
      _
    // Predicated region
    $region50: #{rnn_core_forward.1} parent=1 // pred_check
      _
    $region51: #{rnn_core_forward.1} parent=1 // pred_check_branch
      %718 = sbr.rel (0) target = $region53
    $region52: #{rnn_core_forward.1} parent=1 // pred_region
      %719 = dma.done [#allocation9], 32
    $region53: #{rnn_core_forward.1} parent=1 // pred_fallthru
      _
    %720 = vsyncpa [#allocation3], 1
    %721 = vsyncpa [#allocation6], 1
    %722 = vsyncpa [#allocation4], 1
    %723 = vsyncpa [#allocation9], 1

</llo_original>
